<compile_context>
chip_gen: v5e
topology: v5e:2x2
jax: 0.10.0
libtpu: 0.0.40
codegen_flags: <defaults>
</compile_context>

<pallas_src>
import functools

import jax
import jax.numpy as jnp
from jax.experimental import pallas as pl
from jax.experimental.pallas import tpu as pltpu
import numpy as np


def adder_kernel(x_ref, wih_ref, whh_ref, bias_ref, wout_ref, bout_ref,
                 out_ref, hs_ref, *, T, B):
    """Full RNN recurrence + output layer + sigmoid in one invocation.

    x_ref:    (T*B, D_in)   VMEM  (time-major, batch flattened into rows)
    wih_ref:  (D_in, H)     VMEM  (W_ih^T)
    whh_ref:  (H, H)        VMEM  (W_hh^T)
    bias_ref: (1, H)        VMEM  (b_ih + b_hh, pre-folded)
    wout_ref: (H, D_out)    VMEM  (W_out^T)
    bout_ref: (1, D_out)    VMEM
    out_ref:  (T*B, D_out)  VMEM
    hs_ref:   (T*B, H)      VMEM scratch (collects h_t rows for post-loop GEMM)
    """
    # (1) Hoisted input projection for ALL timesteps: one batched MXU matmul + bias.
    pre = (jnp.dot(x_ref[...], wih_ref[...], preferred_element_type=jnp.float32)
           + bias_ref[...])                                   # (T*B, H)
    whh = whh_ref[...]                                        # (H, H)

    # (2) Serial recurrence, fully unrolled (T static & small). h stays in vregs;
    #     hs_ref is write-only inside the loop (not on the recurrence critical path).
    h = jnp.tanh(pre[0:B, :])                                 # h_0 = 0 -> skip h @ W_hh
    hs_ref[0:B, :] = h
    for t in range(1, T):
        h = jnp.tanh(pre[t * B:(t + 1) * B, :]
                     + jnp.dot(h, whh, preferred_element_type=jnp.float32))
        hs_ref[t * B:(t + 1) * B, :] = h

    # (3) Hoisted output layer: single (T*B, H)@(H, D_out) matmul, single sigmoid,
    #     single store to the output block.
    y = (jnp.dot(hs_ref[...], wout_ref[...], preferred_element_type=jnp.float32)
         + bout_ref[...])
    out_ref[...] = jax.nn.sigmoid(y)


@jax.jit
def adder_forward(x, w_ih, w_hh, b_ih, b_hh, w_out, b_out):
    """x: (T, B, D_in) float32, time-major. Returns (T, B, 1) like the PyTorch module."""
    T, B, D_in = x.shape
    H = w_ih.shape[0]
    D_out = w_out.shape[0]

    # Layout plumbing done once in the wrapper (outside the kernel):
    x2d = x.reshape(T * B, D_in)                 # flatten (T, B) -> rows
    wih_t = jnp.transpose(w_ih)                  # (D_in, H)
    whh_t = jnp.transpose(w_hh)                  # (H, H)
    wout_t = jnp.transpose(w_out)                # (H, D_out)
    bias = (b_ih + b_hh).reshape(1, H)           # fold the two RNN biases
    bout2 = b_out.reshape(1, D_out)

    kernel = functools.partial(adder_kernel, T=T, B=B)

    out2d = pl.pallas_call(
        kernel,
        out_shape=jax.ShapeDtypeStruct((T * B, D_out), jnp.float32),
        grid_spec=pltpu.PrefetchScalarGridSpec(
            num_scalar_prefetch=0,
            grid=(1,),
            in_specs=[
                pl.BlockSpec((T * B, D_in), lambda i: (0, 0)),
                pl.BlockSpec((D_in, H), lambda i: (0, 0)),
                pl.BlockSpec((H, H), lambda i: (0, 0)),
                pl.BlockSpec((1, H), lambda i: (0, 0)),
                pl.BlockSpec((H, D_out), lambda i: (0, 0)),
                pl.BlockSpec((1, D_out), lambda i: (0, 0)),
            ],
            out_specs=pl.BlockSpec((T * B, D_out), lambda i: (0, 0)),
            scratch_shapes=[pltpu.VMEM((T * B, H), jnp.float32)],
        ),
        compiler_params=pltpu.CompilerParams(
            dimension_semantics=("arbitrary",)),
    )(x2d, wih_t, whh_t, bias, wout_t, bout2)

    # TODO(synk): for throughput, batch independent sequences along B (multiple of 8)
    # and add a parallel grid axis so v7x's two TensorCores split the work.
    return out2d.reshape(T, B, D_out)            # matches PyTorch module output (T, B, 1)


def adder_reference(x, w_ih, w_hh, b_ih, b_hh, w_out, b_out):
    """Pure-JAX reference matching nn.RNN(tanh) + Linear + Sigmoid."""
    T, B, _ = x.shape
    H = w_ih.shape[0]
    h = jnp.zeros((B, H), jnp.float32)
    outs = []
    for t in range(T):
        h = jnp.tanh(x[t] @ w_ih.T + b_ih + h @ w_hh.T + b_hh)
        outs.append(jax.nn.sigmoid(h @ w_out.T + b_out))
    return jnp.stack(outs, axis=0)               # (T, B, 1)


if __name__ == "__main__":
    # Small shapes consistent with the module: input dim 2, hidden 32, output 1.
    T, B = 8, 1
    inputDim, hiddenDim, outputDim = 2, 32, 1

    key = jax.random.PRNGKey(0)
    kx, k1, k2, k3, k4, k5, k6 = jax.random.split(key, 7)

    # Deterministic init (uniform(-1/sqrt(H), 1/sqrt(H)), like PyTorch defaults).
    s = 1.0 / np.sqrt(hiddenDim)
    x = jax.random.normal(kx, (T, B, inputDim), dtype=jnp.float32)
    w_ih = jax.random.uniform(k1, (hiddenDim, inputDim), jnp.float32, -s, s)
    w_hh = jax.random.uniform(k2, (hiddenDim, hiddenDim), jnp.float32, -s, s)
    b_ih = jax.random.uniform(k3, (hiddenDim,), jnp.float32, -s, s)
    b_hh = jax.random.uniform(k4, (hiddenDim,), jnp.float32, -s, s)
    w_out = jax.random.uniform(k5, (outputDim, hiddenDim), jnp.float32, -s, s)
    b_out = jax.random.uniform(k6, (outputDim,), jnp.float32, -s, s)

    out = adder_forward(x, w_ih, w_hh, b_ih, b_hh, w_out, b_out)
    out = jax.block_until_ready(out)

    ref = adder_reference(x, w_ih, w_hh, b_ih, b_hh, w_out, b_out)
    np.testing.assert_allclose(np.asarray(out), np.asarray(ref), rtol=1e-5, atol=1e-5)
    assert out.shape == (T, B, outputDim)

    print("KERNEL_OK")
</pallas_src>

<mosaic_0001>
module attributes {stable_mosaic.version = 11 : i64} {
  func.func @adder_kernel(%arg0: i32, %arg1: memref<8x2xf32, #tpu.memory_space<vmem>>, %arg2: memref<2x32xf32, #tpu.memory_space<vmem>>, %arg3: memref<32x32xf32, #tpu.memory_space<vmem>>, %arg4: memref<1x32xf32, #tpu.memory_space<vmem>>, %arg5: memref<32x1xf32, #tpu.memory_space<vmem>>, %arg6: memref<1x1xf32, #tpu.memory_space<vmem>>, %arg7: memref<8x1xf32, #tpu.memory_space<vmem>>, %arg8: memref<8x32xf32, #tpu.memory_space<vmem>>) attributes {dimension_semantics = [#tpu.dimension_semantics<arbitrary>], iteration_bounds = array<i64: 1>, scalar_prefetch = 0 : i64, scratch_operands = 1 : i64, tpu.core_type = #tpu.core_type<tc>, window_params = [{pipeline_mode = #tpu.pipeline_mode<synchronous>, transform_indices = @transform_0, window_bounds = array<i64: 8, 2>}, {pipeline_mode = #tpu.pipeline_mode<synchronous>, transform_indices = @transform_1, window_bounds = array<i64: 2, 32>}, {pipeline_mode = #tpu.pipeline_mode<synchronous>, transform_indices = @transform_2, window_bounds = array<i64: 32, 32>}, {pipeline_mode = #tpu.pipeline_mode<synchronous>, transform_indices = @transform_3, window_bounds = array<i64: 1, 32>}, {pipeline_mode = #tpu.pipeline_mode<synchronous>, transform_indices = @transform_4, window_bounds = array<i64: 32, 1>}, {pipeline_mode = #tpu.pipeline_mode<synchronous>, transform_indices = @transform_5, window_bounds = array<i64: 1, 1>}, {pipeline_mode = #tpu.pipeline_mode<synchronous>, transform_indices = @transform_6, window_bounds = array<i64: 8, 1>}]} {
    %c0 = arith.constant 0 : index
    %c0_0 = arith.constant 0 : index
    %0 = vector.load %arg1[%c0, %c0_0] : memref<8x2xf32, #tpu.memory_space<vmem>>, vector<8x2xf32>
    %c0_1 = arith.constant 0 : index
    %c0_2 = arith.constant 0 : index
    %1 = vector.load %arg2[%c0_1, %c0_2] : memref<2x32xf32, #tpu.memory_space<vmem>>, vector<2x32xf32>
    %cst = arith.constant dense<0.000000e+00> : vector<8x32xf32>
    %2 = tpu.matmul %0, %1, %cst {dimension_numbers = #tpu.dot_dimension_numbers<[1], [0], [0], [1], [0, 0, 1, 1], [], []>} : vector<8x2xf32>, vector<2x32xf32>, vector<8x32xf32> -> vector<8x32xf32>
    %c0_3 = arith.constant 0 : index
    %c0_4 = arith.constant 0 : index
    %3 = vector.load %arg4[%c0_3, %c0_4] : memref<1x32xf32, #tpu.memory_space<vmem>>, vector<1x32xf32>
    %4 = vector.broadcast %3 : vector<1x32xf32> to vector<8x32xf32>
    %5 = arith.addf %2, %4 : vector<8x32xf32>
    %c0_5 = arith.constant 0 : index
    %c0_6 = arith.constant 0 : index
    %6 = vector.load %arg3[%c0_5, %c0_6] : memref<32x32xf32, #tpu.memory_space<vmem>>, vector<32x32xf32>
    %7 = vector.extract_strided_slice %5 {offsets = [0, 0], sizes = [1, 32], strides = [1, 1]} : vector<8x32xf32> to vector<1x32xf32>
    %8 = math.tanh %7 : vector<1x32xf32>
    %c0_7 = arith.constant 0 : index
    %c0_8 = arith.constant 0 : index
    %9 = vector.load %arg8[%c0_7, %c0_8] : memref<8x32xf32, #tpu.memory_space<vmem>>, vector<1x32xf32>
    tpu.vector_store %arg8[%c0_7, %c0_8], %8 {strides = array<i32>} : memref<8x32xf32, #tpu.memory_space<vmem>>, vector<1x32xf32>,
    %10 = vector.extract_strided_slice %5 {offsets = [1, 0], sizes = [1, 32], strides = [1, 1]} : vector<8x32xf32> to vector<1x32xf32>
    %cst_9 = arith.constant dense<0.000000e+00> : vector<1x32xf32>
    %11 = tpu.matmul %8, %6, %cst_9 {dimension_numbers = #tpu.dot_dimension_numbers<[1], [0], [0], [1], [0, 0, 1, 1], [], []>} : vector<1x32xf32>, vector<32x32xf32>, vector<1x32xf32> -> vector<1x32xf32>
    %12 = arith.addf %10, %11 : vector<1x32xf32>
    %13 = math.tanh %12 : vector<1x32xf32>
    %c1 = arith.constant 1 : index
    %c0_10 = arith.constant 0 : index
    %14 = vector.load %arg8[%c1, %c0_10] : memref<8x32xf32, #tpu.memory_space<vmem>>, vector<1x32xf32>
    tpu.vector_store %arg8[%c1, %c0_10], %13 {strides = array<i32>} : memref<8x32xf32, #tpu.memory_space<vmem>>, vector<1x32xf32>,
    %15 = vector.extract_strided_slice %5 {offsets = [2, 0], sizes = [1, 32], strides = [1, 1]} : vector<8x32xf32> to vector<1x32xf32>
    %cst_11 = arith.constant dense<0.000000e+00> : vector<1x32xf32>
    %16 = tpu.matmul %13, %6, %cst_11 {dimension_numbers = #tpu.dot_dimension_numbers<[1], [0], [0], [1], [0, 0, 1, 1], [], []>} : vector<1x32xf32>, vector<32x32xf32>, vector<1x32xf32> -> vector<1x32xf32>
    %17 = arith.addf %15, %16 : vector<1x32xf32>
    %18 = math.tanh %17 : vector<1x32xf32>
    %c2 = arith.constant 2 : index
    %c0_12 = arith.constant 0 : index
    %19 = vector.load %arg8[%c2, %c0_12] : memref<8x32xf32, #tpu.memory_space<vmem>>, vector<1x32xf32>
    tpu.vector_store %arg8[%c2, %c0_12], %18 {strides = array<i32>} : memref<8x32xf32, #tpu.memory_space<vmem>>, vector<1x32xf32>,
    %20 = vector.extract_strided_slice %5 {offsets = [3, 0], sizes = [1, 32], strides = [1, 1]} : vector<8x32xf32> to vector<1x32xf32>
    %cst_13 = arith.constant dense<0.000000e+00> : vector<1x32xf32>
    %21 = tpu.matmul %18, %6, %cst_13 {dimension_numbers = #tpu.dot_dimension_numbers<[1], [0], [0], [1], [0, 0, 1, 1], [], []>} : vector<1x32xf32>, vector<32x32xf32>, vector<1x32xf32> -> vector<1x32xf32>
    %22 = arith.addf %20, %21 : vector<1x32xf32>
    %23 = math.tanh %22 : vector<1x32xf32>
    %c3 = arith.constant 3 : index
    %c0_14 = arith.constant 0 : index
    %24 = vector.load %arg8[%c3, %c0_14] : memref<8x32xf32, #tpu.memory_space<vmem>>, vector<1x32xf32>
    tpu.vector_store %arg8[%c3, %c0_14], %23 {strides = array<i32>} : memref<8x32xf32, #tpu.memory_space<vmem>>, vector<1x32xf32>,
    %25 = vector.extract_strided_slice %5 {offsets = [4, 0], sizes = [1, 32], strides = [1, 1]} : vector<8x32xf32> to vector<1x32xf32>
    %cst_15 = arith.constant dense<0.000000e+00> : vector<1x32xf32>
    %26 = tpu.matmul %23, %6, %cst_15 {dimension_numbers = #tpu.dot_dimension_numbers<[1], [0], [0], [1], [0, 0, 1, 1], [], []>} : vector<1x32xf32>, vector<32x32xf32>, vector<1x32xf32> -> vector<1x32xf32>
    %27 = arith.addf %25, %26 : vector<1x32xf32>
    %28 = math.tanh %27 : vector<1x32xf32>
    %c4 = arith.constant 4 : index
    %c0_16 = arith.constant 0 : index
    %29 = vector.load %arg8[%c4, %c0_16] : memref<8x32xf32, #tpu.memory_space<vmem>>, vector<1x32xf32>
    tpu.vector_store %arg8[%c4, %c0_16], %28 {strides = array<i32>} : memref<8x32xf32, #tpu.memory_space<vmem>>, vector<1x32xf32>,
    %30 = vector.extract_strided_slice %5 {offsets = [5, 0], sizes = [1, 32], strides = [1, 1]} : vector<8x32xf32> to vector<1x32xf32>
    %cst_17 = arith.constant dense<0.000000e+00> : vector<1x32xf32>
    %31 = tpu.matmul %28, %6, %cst_17 {dimension_numbers = #tpu.dot_dimension_numbers<[1], [0], [0], [1], [0, 0, 1, 1], [], []>} : vector<1x32xf32>, vector<32x32xf32>, vector<1x32xf32> -> vector<1x32xf32>
    %32 = arith.addf %30, %31 : vector<1x32xf32>
    %33 = math.tanh %32 : vector<1x32xf32>
    %c5 = arith.constant 5 : index
    %c0_18 = arith.constant 0 : index
    %34 = vector.load %arg8[%c5, %c0_18] : memref<8x32xf32, #tpu.memory_space<vmem>>, vector<1x32xf32>
    tpu.vector_store %arg8[%c5, %c0_18], %33 {strides = array<i32>} : memref<8x32xf32, #tpu.memory_space<vmem>>, vector<1x32xf32>,
    %35 = vector.extract_strided_slice %5 {offsets = [6, 0], sizes = [1, 32], strides = [1, 1]} : vector<8x32xf32> to vector<1x32xf32>
    %cst_19 = arith.constant dense<0.000000e+00> : vector<1x32xf32>
    %36 = tpu.matmul %33, %6, %cst_19 {dimension_numbers = #tpu.dot_dimension_numbers<[1], [0], [0], [1], [0, 0, 1, 1], [], []>} : vector<1x32xf32>, vector<32x32xf32>, vector<1x32xf32> -> vector<1x32xf32>
    %37 = arith.addf %35, %36 : vector<1x32xf32>
    %38 = math.tanh %37 : vector<1x32xf32>
    %c6 = arith.constant 6 : index
    %c0_20 = arith.constant 0 : index
    %39 = vector.load %arg8[%c6, %c0_20] : memref<8x32xf32, #tpu.memory_space<vmem>>, vector<1x32xf32>
    tpu.vector_store %arg8[%c6, %c0_20], %38 {strides = array<i32>} : memref<8x32xf32, #tpu.memory_space<vmem>>, vector<1x32xf32>,
    %40 = vector.extract_strided_slice %5 {offsets = [7, 0], sizes = [1, 32], strides = [1, 1]} : vector<8x32xf32> to vector<1x32xf32>
    %cst_21 = arith.constant dense<0.000000e+00> : vector<1x32xf32>
    %41 = tpu.matmul %38, %6, %cst_21 {dimension_numbers = #tpu.dot_dimension_numbers<[1], [0], [0], [1], [0, 0, 1, 1], [], []>} : vector<1x32xf32>, vector<32x32xf32>, vector<1x32xf32> -> vector<1x32xf32>
    %42 = arith.addf %40, %41 : vector<1x32xf32>
    %43 = math.tanh %42 : vector<1x32xf32>
    %c7 = arith.constant 7 : index
    %c0_22 = arith.constant 0 : index
    %44 = vector.load %arg8[%c7, %c0_22] : memref<8x32xf32, #tpu.memory_space<vmem>>, vector<1x32xf32>
    tpu.vector_store %arg8[%c7, %c0_22], %43 {strides = array<i32>} : memref<8x32xf32, #tpu.memory_space<vmem>>, vector<1x32xf32>,
    %c0_23 = arith.constant 0 : index
    %c0_24 = arith.constant 0 : index
    %45 = vector.load %arg8[%c0_23, %c0_24] : memref<8x32xf32, #tpu.memory_space<vmem>>, vector<8x32xf32>
    %c0_25 = arith.constant 0 : index
    %c0_26 = arith.constant 0 : index
    %46 = vector.load %arg5[%c0_25, %c0_26] : memref<32x1xf32, #tpu.memory_space<vmem>>, vector<32x1xf32>
    %cst_27 = arith.constant dense<0.000000e+00> : vector<8x1xf32>
    %47 = tpu.matmul %45, %46, %cst_27 {dimension_numbers = #tpu.dot_dimension_numbers<[1], [0], [0], [1], [0, 0, 1, 1], [], []>} : vector<8x32xf32>, vector<32x1xf32>, vector<8x1xf32> -> vector<8x1xf32>
    %c0_28 = arith.constant 0 : index
    %c0_29 = arith.constant 0 : index
    %48 = vector.load %arg6[%c0_28, %c0_29] : memref<1x1xf32, #tpu.memory_space<vmem>>, vector<1x1xf32>
    %49 = vector.broadcast %48 : vector<1x1xf32> to vector<8x1xf32>
    %50 = arith.addf %47, %49 : vector<8x1xf32>
    %51 = arith.negf %50 : vector<8x1xf32>
    %52 = math.exp %51 : vector<8x1xf32>
    %cst_30 = arith.constant 1.000000e+00 : f32
    %53 = vector.broadcast %cst_30 : f32 to vector<8x1xf32>
    %54 = arith.addf %53, %52 : vector<8x1xf32>
    %55 = arith.divf %53, %54 : vector<8x1xf32>
    %c0_31 = arith.constant 0 : index
    %c0_32 = arith.constant 0 : index
    %56 = vector.load %arg7[%c0_31, %c0_32] : memref<8x1xf32, #tpu.memory_space<vmem>>, vector<8x1xf32>
    tpu.vector_store %arg7[%c0_31, %c0_32], %55 {strides = array<i32>} : memref<8x1xf32, #tpu.memory_space<vmem>>, vector<8x1xf32>,
    return
  }
  func.func @transform_0(%arg0: i32) -> (i32, i32) {
    %c0_i32 = arith.constant 0 : i32
    %c0_i32_0 = arith.constant 0 : i32
    %c0_i32_1 = arith.constant 0 : i32
    return %c0_i32, %c0_i32_0 : i32, i32
  }
  func.func @transform_1(%arg0: i32) -> (i32, i32) {
    %c0_i32 = arith.constant 0 : i32
    %c0_i32_0 = arith.constant 0 : i32
    %c0_i32_1 = arith.constant 0 : i32
    return %c0_i32, %c0_i32_0 : i32, i32
  }
  func.func @transform_2(%arg0: i32) -> (i32, i32) {
    %c0_i32 = arith.constant 0 : i32
    %c0_i32_0 = arith.constant 0 : i32
    %c0_i32_1 = arith.constant 0 : i32
    return %c0_i32, %c0_i32_0 : i32, i32
  }
  func.func @transform_3(%arg0: i32) -> (i32, i32) {
    %c0_i32 = arith.constant 0 : i32
    %c0_i32_0 = arith.constant 0 : i32
    %c0_i32_1 = arith.constant 0 : i32
    return %c0_i32, %c0_i32_0 : i32, i32
  }
  func.func @transform_4(%arg0: i32) -> (i32, i32) {
    %c0_i32 = arith.constant 0 : i32
    %c0_i32_0 = arith.constant 0 : i32
    %c0_i32_1 = arith.constant 0 : i32
    return %c0_i32, %c0_i32_0 : i32, i32
  }
  func.func @transform_5(%arg0: i32) -> (i32, i32) {
    %c0_i32 = arith.constant 0 : i32
    %c0_i32_0 = arith.constant 0 : i32
    %c0_i32_1 = arith.constant 0 : i32
    return %c0_i32, %c0_i32_0 : i32, i32
  }
  func.func @transform_6(%arg0: i32) -> (i32, i32) {
    %c0_i32 = arith.constant 0 : i32
    %c0_i32_0 = arith.constant 0 : i32
    %c0_i32_1 = arith.constant 0 : i32
    return %c0_i32, %c0_i32_0 : i32, i32
  }
}

</mosaic_0001>

<llo_original>
// kernel: adder_forward.1
$region0: #{adder_forward.1}
  #allocation0 [shape = 'u32[]', space=smem, size = 0x4, offset = 0x4, fixed_abs, tag = 'smem constant byte address 0x4 - core index']
  #allocation1 [shape = 'u32[72,128]{1,0:T(1,128)}', space=vmem, size = 0x9000, scoped, tag = 'internal scratch']
  #allocation2 [shape = 'f32[8,32]{1,0:T(8,128)}', space=vmem, size = 0x1000, scoped, tag = 'scratch operand']
  #allocation3 [shape = 'f32[1,1]{1,0:T(1,128)S(1)}', space=vmem, size = 0x200, scoped, tag = 'scoped memory for adder_forward.1']
  %s0 = inlined_call_operand.vmem [shape: f32[8,2], index: 0, kind: input, shape index: {}]
  %s1 = inlined_call_operand.vmem [shape: f32[2,32], index: 1, kind: input, shape index: {}]
  %s2 = inlined_call_operand.vmem [shape: f32[32,32], index: 2, kind: input, shape index: {}]
  %s3 = inlined_call_operand.vmem [shape: f32[1,32], index: 3, kind: input, shape index: {}]
  %s4 = inlined_call_operand.vmem [shape: f32[32,1], index: 4, kind: input, shape index: {}]
  %s5 = inlined_call_operand.<no memory space> [shape: f32[1,1], index: 5, kind: input, shape index: {}]
  %s6 = inlined_call_operand.vmem [shape: f32[8,1], index: 6, kind: output, shape index: {}]
  %s7 = sld [smem:[#allocation0]]
  $region34: #{adder_forward.1} parent=0
    _
  %s9 = ssub.s32 1, %s7
  %s10 = scalar_select 0, %s9, %s7
  %v11 = vstv %s5
  %12 = vst [vmem:[#allocation3] sm:$0x1] %v11
  // Predicated region
  $region2: #{adder_forward.1} parent=0 // pred_check
    _
  $region3: #{adder_forward.1} parent=0 // pred_check_branch
    %14 = sbr.rel (0) target = $region5
  $region4: #{adder_forward.1} parent=0 // pred_region
    _
  $region5: #{adder_forward.1} parent=0 // pred_fallthru
    _
  // Predicated region
  $region6: #{adder_forward.1} parent=0 // pred_check
    _
  $region7: #{adder_forward.1} parent=0 // pred_check_branch
    %16 = sbr.rel (0) target = $region9
  $region8: #{adder_forward.1} parent=0 // pred_region
    _
  $region9: #{adder_forward.1} parent=0 // pred_fallthru
    _
  // Predicated region
  $region10: #{adder_forward.1} parent=0 // pred_check
    _
  $region11: #{adder_forward.1} parent=0 // pred_check_branch
    %18 = sbr.rel (0) target = $region13
  $region12: #{adder_forward.1} parent=0 // pred_region
    _
  $region13: #{adder_forward.1} parent=0 // pred_fallthru
    _
  // Predicated region
  $region14: #{adder_forward.1} parent=0 // pred_check
    _
  $region15: #{adder_forward.1} parent=0 // pred_check_branch
    %20 = sbr.rel (0) target = $region17
  $region16: #{adder_forward.1} parent=0 // pred_region
    _
  $region17: #{adder_forward.1} parent=0 // pred_fallthru
    _
  // Predicated region
  $region18: #{adder_forward.1} parent=0 // pred_check
    _
  $region19: #{adder_forward.1} parent=0 // pred_check_branch
    %22 = sbr.rel (0) target = $region21
  $region20: #{adder_forward.1} parent=0 // pred_region
    _
  $region21: #{adder_forward.1} parent=0 // pred_fallthru
    _
  // Predicated region
  $region22: #{adder_forward.1} parent=0 // pred_check
    _
  $region23: #{adder_forward.1} parent=0 // pred_check_branch
    %24 = sbr.rel (0) target = $region25
  $region24: #{adder_forward.1} parent=0 // pred_region
    _
  $region25: #{adder_forward.1} parent=0 // pred_fallthru
    _
  %v25 = vld [vmem:[%s0] sm:$0xff]
  %v26 = vld [vmem:[%s1] sm:$0x3]
  %v27 = vld [vmem:[%s3] sm:$0x1]
  %v29 = vperm.slane %v27, 0
  %vm31 = vcmask 15360
  %v33 = vsel %vm31, %v25, 0
  %vm35 = vcmask 1041408
  %v37 = vsel %vm35, %v26, 0
  %39 = vmatpush.msra.mxu0 0.0
  %40 = vmatpush.msra.mxu0 0.0
  %41 = vmatpush.msra.mxu0 0.0
  %42 = vmatpush.msra.mxu0 0.0
  %43 = vmatpush.msra.mxu0 0.0
  %44 = vmatpush.msra.mxu0 0.0
  %45 = vmatpush.msra.mxu0 0.0
  %46 = vmatpush.msra.mxu0 0.0
  %47 = vmatpush.msra.mxu0 0.0
  %48 = vmatpush.msra.mxu0 0.0
  %49 = vmatpush.msra.mxu0 0.0
  %50 = vmatpush.msra.mxu0 0.0
  %51 = vmatpush.msra.mxu0 0.0
  %52 = vmatpush.msra.mxu0 0.0
  %53 = vmatpush.msra.mxu0 0.0
  %54 = vmatpush.msra.mxu0 %v37
  %55 = vmatmul.f32.gmra.mxu0 %v33
  %v56 = vpop.f32.mrf.mxu0
  %v57 = vadd.f32 %v29, %v56
  %58 = vdwg.mxu0
  %v59 = vld [vmem:[%s2] sm:$0xff]
  %v60 = vld [vmem:[%s2 + $0x8] sm:$0xff]
  %v61 = vld [vmem:[%s2 + $0x10] sm:$0xff]
  %v62 = vld [vmem:[%s2 + $0x18] sm:$0xff]
  %v63 = vtanh.pop %v57
  %vm64 = vcmask 253952
  %65 = vst.msk [vmem:[#allocation2] sm:$0x1] %vm64, %v63
  %vm66 = vcmask 261120
  %v68 = vsel %vm66, %v63, 0
  %70 = vmatpush.msra.mxu0 0.0
  %71 = vmatpush.msra.mxu0 0.0
  %72 = vmatpush.msra.mxu0 0.0
  %73 = vmatpush.msra.mxu0 0.0
  %74 = vmatpush.msra.mxu0 0.0
  %75 = vmatpush.msra.mxu0 0.0
  %76 = vmatpush.msra.mxu0 0.0
  %77 = vmatpush.msra.mxu0 0.0
  %78 = vmatpush.msra.mxu0 0.0
  %79 = vmatpush.msra.mxu0 0.0
  %80 = vmatpush.msra.mxu0 0.0
  %81 = vmatpush.msra.mxu0 0.0
  %82 = vmatpush.msra.mxu0 %v62
  %83 = vmatpush.msra.mxu0 %v61
  %84 = vmatpush.msra.mxu0 %v60
  %85 = vmatpush.msra.mxu0 %v59
  %86 = vmatmul.f32.gmra.mxu0 %v68
  %v87 = vpop.f32.mrf.mxu0
  %v88 = vadd.f32 0.0, %v87
  %89 = vdwg.mxu0
  %v91 = vrot.slane %v88, 7
  %v93 = vadd.f32 %v57, %v91
  %v94 = vtanh.pop %v93
  %vm95 = vcmask 254977
  %96 = vst.msk [vmem:[#allocation2] sm:$0x2] %vm95, %v94
  %v98 = vrot.slane %v94, 1
  %v99 = vsel %vm66, %v98, 0
  %101 = vmatpush.msra.mxu0 0.0
  %102 = vmatpush.msra.mxu0 0.0
  %103 = vmatpush.msra.mxu0 0.0
  %104 = vmatpush.msra.mxu0 0.0
  %105 = vmatpush.msra.mxu0 0.0
  %106 = vmatpush.msra.mxu0 0.0
  %107 = vmatpush.msra.mxu0 0.0
  %108 = vmatpush.msra.mxu0 0.0
  %109 = vmatpush.msra.mxu0 0.0
  %110 = vmatpush.msra.mxu0 0.0
  %111 = vmatpush.msra.mxu0 0.0
  %112 = vmatpush.msra.mxu0 0.0
  %113 = vmatpush.msra.mxu0 %v62
  %114 = vmatpush.msra.mxu0 %v61
  %115 = vmatpush.msra.mxu0 %v60
  %116 = vmatpush.msra.mxu0 %v59
  %117 = vmatmul.f32.gmra.mxu0 %v99
  %v118 = vpop.f32.mrf.mxu0
  %v119 = vadd.f32 0.0, %v118
  %120 = vdwg.mxu0
  %v122 = vrot.slane %v119, 6
  %v124 = vadd.f32 %v57, %v122
  %v125 = vtanh.pop %v124
  %vm126 = vcmask 256002
  %127 = vst.msk [vmem:[#allocation2] sm:$0x4] %vm126, %v125
  %v129 = vrot.slane %v125, 2
  %v130 = vsel %vm66, %v129, 0
  %132 = vmatpush.msra.mxu0 0.0
  %133 = vmatpush.msra.mxu0 0.0
  %134 = vmatpush.msra.mxu0 0.0
  %135 = vmatpush.msra.mxu0 0.0
  %136 = vmatpush.msra.mxu0 0.0
  %137 = vmatpush.msra.mxu0 0.0
  %138 = vmatpush.msra.mxu0 0.0
  %139 = vmatpush.msra.mxu0 0.0
  %140 = vmatpush.msra.mxu0 0.0
  %141 = vmatpush.msra.mxu0 0.0
  %142 = vmatpush.msra.mxu0 0.0
  %143 = vmatpush.msra.mxu0 0.0
  %144 = vmatpush.msra.mxu0 %v62
  %145 = vmatpush.msra.mxu0 %v61
  %146 = vmatpush.msra.mxu0 %v60
  %147 = vmatpush.msra.mxu0 %v59
  %148 = vmatmul.f32.gmra.mxu0 %v130
  %v149 = vpop.f32.mrf.mxu0
  %v150 = vadd.f32 0.0, %v149
  %151 = vdwg.mxu0
  %v153 = vrot.slane %v150, 5
  %v155 = vadd.f32 %v57, %v153
  %v156 = vtanh.pop %v155
  %vm157 = vcmask 257027
  %158 = vst.msk [vmem:[#allocation2] sm:$0x8] %vm157, %v156
  %v160 = vrot.slane %v156, 3
  %v161 = vsel %vm66, %v160, 0
  %163 = vmatpush.msra.mxu0 0.0
  %164 = vmatpush.msra.mxu0 0.0
  %165 = vmatpush.msra.mxu0 0.0
  %166 = vmatpush.msra.mxu0 0.0
  %167 = vmatpush.msra.mxu0 0.0
  %168 = vmatpush.msra.mxu0 0.0
  %169 = vmatpush.msra.mxu0 0.0
  %170 = vmatpush.msra.mxu0 0.0
  %171 = vmatpush.msra.mxu0 0.0
  %172 = vmatpush.msra.mxu0 0.0
  %173 = vmatpush.msra.mxu0 0.0
  %174 = vmatpush.msra.mxu0 0.0
  %175 = vmatpush.msra.mxu0 %v62
  %176 = vmatpush.msra.mxu0 %v61
  %177 = vmatpush.msra.mxu0 %v60
  %178 = vmatpush.msra.mxu0 %v59
  %179 = vmatmul.f32.gmra.mxu0 %v161
  %v180 = vpop.f32.mrf.mxu0
  %v181 = vadd.f32 0.0, %v180
  %182 = vdwg.mxu0
  %v184 = vrot.slane %v181, 4
  %v186 = vadd.f32 %v57, %v184
  %v187 = vtanh.pop %v186
  %vm188 = vcmask 258052
  %189 = vst.msk [vmem:[#allocation2] sm:$0x10] %vm188, %v187
  %v191 = vrot.slane %v187, 4
  %v192 = vsel %vm66, %v191, 0
  %194 = vmatpush.msra.mxu0 0.0
  %195 = vmatpush.msra.mxu0 0.0
  %196 = vmatpush.msra.mxu0 0.0
  %197 = vmatpush.msra.mxu0 0.0
  %198 = vmatpush.msra.mxu0 0.0
  %199 = vmatpush.msra.mxu0 0.0
  %200 = vmatpush.msra.mxu0 0.0
  %201 = vmatpush.msra.mxu0 0.0
  %202 = vmatpush.msra.mxu0 0.0
  %203 = vmatpush.msra.mxu0 0.0
  %204 = vmatpush.msra.mxu0 0.0
  %205 = vmatpush.msra.mxu0 0.0
  %206 = vmatpush.msra.mxu0 %v62
  %207 = vmatpush.msra.mxu0 %v61
  %208 = vmatpush.msra.mxu0 %v60
  %209 = vmatpush.msra.mxu0 %v59
  %210 = vmatmul.f32.gmra.mxu0 %v192
  %v211 = vpop.f32.mrf.mxu0
  %v212 = vadd.f32 0.0, %v211
  %213 = vdwg.mxu0
  %v215 = vrot.slane %v212, 3
  %v217 = vadd.f32 %v57, %v215
  %v218 = vtanh.pop %v217
  %vm219 = vcmask 259077
  %220 = vst.msk [vmem:[#allocation2] sm:$0x20] %vm219, %v218
  %v222 = vrot.slane %v218, 5
  %v223 = vsel %vm66, %v222, 0
  %225 = vmatpush.msra.mxu0 0.0
  %226 = vmatpush.msra.mxu0 0.0
  %227 = vmatpush.msra.mxu0 0.0
  %228 = vmatpush.msra.mxu0 0.0
  %229 = vmatpush.msra.mxu0 0.0
  %230 = vmatpush.msra.mxu0 0.0
  %231 = vmatpush.msra.mxu0 0.0
  %232 = vmatpush.msra.mxu0 0.0
  %233 = vmatpush.msra.mxu0 0.0
  %234 = vmatpush.msra.mxu0 0.0
  %235 = vmatpush.msra.mxu0 0.0
  %236 = vmatpush.msra.mxu0 0.0
  %237 = vmatpush.msra.mxu0 %v62
  %238 = vmatpush.msra.mxu0 %v61
  %239 = vmatpush.msra.mxu0 %v60
  %240 = vmatpush.msra.mxu0 %v59
  %241 = vmatmul.f32.gmra.mxu0 %v223
  %v242 = vpop.f32.mrf.mxu0
  %v243 = vadd.f32 0.0, %v242
  %244 = vdwg.mxu0
  %v246 = vrot.slane %v243, 2
  %v248 = vadd.f32 %v57, %v246
  %v249 = vtanh.pop %v248
  %vm250 = vcmask 260102
  %251 = vst.msk [vmem:[#allocation2] sm:$0x40] %vm250, %v249
  %v253 = vrot.slane %v249, 6
  %v254 = vsel %vm66, %v253, 0
  %256 = vmatpush.msra.mxu0 0.0
  %257 = vmatpush.msra.mxu0 0.0
  %258 = vmatpush.msra.mxu0 0.0
  %259 = vmatpush.msra.mxu0 0.0
  %260 = vmatpush.msra.mxu0 0.0
  %261 = vmatpush.msra.mxu0 0.0
  %262 = vmatpush.msra.mxu0 0.0
  %263 = vmatpush.msra.mxu0 0.0
  %264 = vmatpush.msra.mxu0 0.0
  %265 = vmatpush.msra.mxu0 0.0
  %266 = vmatpush.msra.mxu0 0.0
  %267 = vmatpush.msra.mxu0 0.0
  %268 = vmatpush.msra.mxu0 %v62
  %269 = vmatpush.msra.mxu0 %v61
  %270 = vmatpush.msra.mxu0 %v60
  %271 = vmatpush.msra.mxu0 %v59
  %272 = vmatmul.f32.gmra.mxu0 %v254
  %v273 = vpop.f32.mrf.mxu0
  %v274 = vadd.f32 0.0, %v273
  %275 = vdwg.mxu0
  %v277 = vrot.slane %v274, 1
  %v279 = vadd.f32 %v57, %v277
  %v280 = vtanh.pop %v279
  %vm281 = vcmask 261127
  %282 = vst.msk [vmem:[#allocation2] sm:$0x80] %vm281, %v280
  %v283 = vld [vmem:[#allocation2] sm:$0xff]
  %v284 = vld [vmem:[%s4] sm:$0xff]
  %v285 = vld [vmem:[%s4 + $0x8] sm:$0xff]
  %v286 = vld [vmem:[%s4 + $0x10] sm:$0xff]
  %v287 = vld [vmem:[%s4 + $0x18] sm:$0xff]
  %v288 = vld [vmem:[#allocation3] sm:$0x1]
  %v290 = vperm.slane %v288, 0
  %v293 = vsel %vm66, %v283, 0
  %295 = vmatpush.msra.mxu0 0.0
  %296 = vmatpush.msra.mxu0 0.0
  %297 = vmatpush.msra.mxu0 0.0
  %298 = vmatpush.msra.mxu0 0.0
  %299 = vmatpush.msra.mxu0 0.0
  %300 = vmatpush.msra.mxu0 0.0
  %301 = vmatpush.msra.mxu0 0.0
  %302 = vmatpush.msra.mxu0 0.0
  %303 = vmatpush.msra.mxu0 0.0
  %304 = vmatpush.msra.mxu0 0.0
  %305 = vmatpush.msra.mxu0 0.0
  %306 = vmatpush.msra.mxu0 0.0
  %307 = vmatpush.msra.mxu0 %v287
  %308 = vmatpush.msra.mxu0 %v286
  %309 = vmatpush.msra.mxu0 %v285
  %310 = vmatpush.msra.mxu0 %v284
  %311 = vmatmul.f32.gmra.mxu0 %v293
  %v312 = vpop.f32.mrf.mxu0
  %v313 = vadd.f32 %v290, %v312
  %314 = vdwg.mxu0
  %v315 = vxor.u32 %v313, 2147483648
  %v316 = vmul.f32 %v315, 1.442695
  %v317 = vpow.pop %v316
  %v318 = vadd.f32 %v317, 1.0
  %v319 = vrcp.pop %v318
  %v320 = vmul.f32 %v318, %v319
  %v321 = vsub.f32 1.0, %v320
  %v322 = vmul.f32 %v319, %v321
  %v323 = vadd.f32 %v319, %v322
  %vm324 = vweird.f32 %v318
  %vm325 = vweird.f32 %v319
  %vm326 = vmor %vm324, %vm325
  %v327 = vsel %vm326, %v319, %v323
  %v328 = vand.u32 2147483647, %v318
  %vm329 = vcmp.eq.f32.partialorder %v328, 8.507059e+37
  %v330 = vand.u32 %v318, 2147483648
  %v331 = vor.u32 1.1754944e-38, %v330
  %v332 = vsel %vm329, %v331, %v327
  %v333 = vmul.f32 1.0, %v332
  %vm334 = vcmask 7168
  %335 = vst.msk [vmem:[%s6] sm:$0xff] %vm334, %v333
  // Predicated region
  $region26: #{adder_forward.1} parent=0 // pred_check
    _
  $region27: #{adder_forward.1} parent=0 // pred_check_branch
    %337 = sbr.rel (0) target = $region29
  $region28: #{adder_forward.1} parent=0 // pred_region
    _
  $region29: #{adder_forward.1} parent=0 // pred_fallthru
    _
  // Predicated region
  $region30: #{adder_forward.1} parent=0 // pred_check
    _
  $region31: #{adder_forward.1} parent=0 // pred_check_branch
    %339 = sbr.rel (0) target = $region33
  $region32: #{adder_forward.1} parent=0 // pred_region
    _
  $region33: #{adder_forward.1} parent=0 // pred_fallthru
    _

</llo_original>
